<compile_context>
chip_gen: v5e
topology: v5e:2x2
jax: 0.10.0
libtpu: 0.0.40
codegen_flags: <defaults>
</compile_context>

<pallas_src>
import jax
import jax.numpy as jnp
from jax.experimental import pallas as pl
from jax.experimental.pallas import tpu as pltpu


def _round_up(x, m):
    return (x + m - 1) // m * m


def _pick_tile(n, candidates):
    """Largest candidate that evenly divides n (n is already aligned)."""
    for c in candidates:
        if c <= n and n % c == 0:
            return c
    return n


def _neg_loss_kernel(o_ref, t_ref, part_ref):
    """Accumulate sum(log(1-o) * o^2 * (1-t)^4) along the column (reduction) axis."""
    j = pl.program_id(1)

    @pl.when(j == 0)
    def _init():
        part_ref[...] = jnp.zeros_like(part_ref)

    # DMA happens in the input dtype; upcast per tile for the VPU/EUP math.
    o = o_ref[...].astype(jnp.float32)
    t = t_ref[...].astype(jnp.float32)
    g = 1.0 - t
    g2 = g * g
    neg = jnp.log(1.0 - o) * (o * o) * (g2 * g2)
    # Scalar per-tile partial, broadcast over the lane-dense (1, 8, 128) block.
    part_ref[...] = part_ref[...] + jnp.sum(neg)


def _neg_loss_sum(out2d, tgt2d):
    """Tiled Pallas reduction of the negative-sample focal term over (B*C, H*W)."""
    BC, HW = out2d.shape

    # Align to (8, 128); zero padding contributes exactly 0 to the sum
    # (out=0 -> o^2 = 0 kills the term regardless of the target pad value).
    r_pad = _round_up(BC, 8)
    c_pad = _round_up(HW, 128)

    # Biggest lane-dense column tile, then cap the row tile so one f32 tile is
    # ~1 MiB (2 inputs x 2 pipeline buffers ~4-8 MiB total: fits the default
    # scoped-VMEM on v5e/v6e/v7x while sitting near the HBM roofline).
    max_tile_elems = 256 * 1024
    tc = _pick_tile(c_pad, (2048, 1024, 512, 256, 128))
    tr_cap = max(8, max_tile_elems // tc)
    tr = _pick_tile(
        r_pad, tuple(c for c in (512, 256, 128, 64, 32, 16, 8) if c <= tr_cap))

    if (r_pad, c_pad) != (BC, HW):
        pad = ((0, r_pad - BC), (0, c_pad - HW))
        out2d = jnp.pad(out2d, pad)
        tgt2d = jnp.pad(tgt2d, pad)

    r_tiles = r_pad // tr
    c_tiles = c_pad // tc

    bytes_in = r_pad * c_pad * (jnp.dtype(out2d.dtype).itemsize
                                + jnp.dtype(tgt2d.dtype).itemsize)
    cost = pl.CostEstimate(
        flops=9 * r_pad * c_pad,
        transcendentals=r_pad * c_pad,
        bytes_accessed=bytes_in + r_tiles * 8 * 128 * 4,
    )

    partials = pl.pallas_call(
        _neg_loss_kernel,
        out_shape=jax.ShapeDtypeStruct((r_tiles, 8, 128), jnp.float32),
        grid=(r_tiles, c_tiles),
        in_specs=[
            pl.BlockSpec((tr, tc), lambda i, j: (i, j)),
            pl.BlockSpec((tr, tc), lambda i, j: (i, j)),
        ],
        out_specs=pl.BlockSpec((1, 8, 128), lambda i, j: (i, 0, 0)),
        compiler_params=pltpu.CompilerParams(
            dimension_semantics=("parallel", "arbitrary"),
            vmem_limit_bytes=32 * 1024 * 1024,
        ),
        cost_estimate=cost,
    )(out2d, tgt2d)

    # Every element of a (8,128) partial block holds the same accumulated value.
    return jnp.sum(partials[:, 0, 0])


def fast_focal_loss(out, target, ind, mask, cat):
    """JAX/Pallas equivalent of FastFocalLoss.forward.

    Args:
      out, target: (B, C, H, W) float heatmaps (out assumed in (0, 1)).
      ind, mask:   (B, M) flat spatial peak index / valid mask.
      cat:         (B, M) int category id per peak.
    Returns:
      scalar float32 loss.
    """
    B, C, H, W = out.shape
    HW = H * W

    # ---- negative term: tiled, pipelined Pallas reduction over the heatmap ----
    neg_loss = _neg_loss_sum(out.reshape(B * C, HW), target.reshape(B * C, HW))

    # ---- positive term: only B*M scalars -> cheap flat gather in plain JAX ----
    ind_i = ind.astype(jnp.int32)
    cat_i = cat.astype(jnp.int32)
    mask_f = mask.astype(jnp.float32)
    flat = out.reshape(B, C * HW)
    # out[b, cat[b,m], ind[b,m]] == flat[b, cat[b,m]*HW + ind[b,m]]
    pos_pred = jnp.take_along_axis(flat, cat_i * HW + ind_i, axis=1)
    pos_pred = pos_pred.astype(jnp.float32)

    num_pos = jnp.sum(mask_f)
    pos_loss = jnp.sum(jnp.log(pos_pred) * jnp.square(1.0 - pos_pred) * mask_f)

    return jnp.where(num_pos == 0.0, -neg_loss, -(pos_loss + neg_loss) / num_pos)


def fast_focal_loss_ref(out, target, ind, mask, cat):
    """Pure-JAX reference mirroring the PyTorch code."""
    B, C, H, W = out.shape
    mask = mask.astype(jnp.float32)
    gt = jnp.power(1.0 - target, 4)
    neg_loss = jnp.sum(jnp.log(1.0 - out) * jnp.power(out, 2) * gt)
    # _transpose_and_gather_feat: NCHW -> (B, HW, C), gather ind, then gather cat.
    feat = jnp.transpose(out, (0, 2, 3, 1)).reshape(B, H * W, C)
    pos_pred_pix = jnp.take_along_axis(feat, ind[:, :, None], axis=1)       # B x M x C
    pos_pred = jnp.take_along_axis(pos_pred_pix, cat[:, :, None], axis=2)   # B x M x 1
    num_pos = jnp.sum(mask)
    pos_loss = jnp.sum(jnp.log(pos_pred) * jnp.power(1.0 - pos_pred, 2)
                       * mask[:, :, None])
    return jnp.where(num_pos == 0.0, -neg_loss, -(pos_loss + neg_loss) / num_pos)


if __name__ == "__main__":
    B, C, H, W, M = 2, 4, 16, 16, 8
    key = jax.random.PRNGKey(0)
    k1, k2, k3, k4, k5 = jax.random.split(key, 5)

    # Predicted heatmap in (0, 1) (post-sigmoid), like CenterNet.
    out = jax.nn.sigmoid(jax.random.normal(k1, (B, C, H, W), jnp.float32))
    out = jnp.clip(out, 1e-4, 1.0 - 1e-4)
    # Target heatmap in [0, 1).
    target = jax.random.uniform(k2, (B, C, H, W), jnp.float32, 0.0, 0.99)
    ind = jax.random.randint(k3, (B, M), 0, H * W, jnp.int32)
    cat = jax.random.randint(k4, (B, M), 0, C, jnp.int32)
    mask = (jax.random.uniform(k5, (B, M)) > 0.5).astype(jnp.float32)

    loss = jax.block_until_ready(fast_focal_loss(out, target, ind, mask, cat))
    ref = jax.block_until_ready(fast_focal_loss_ref(out, target, ind, mask, cat))

    assert jnp.isfinite(loss), f"non-finite loss: {loss}"
    assert jnp.allclose(loss, ref, rtol=1e-4, atol=1e-4), f"{loss} vs {ref}"
    print("KERNEL_OK")
</pallas_src>

<mosaic_0001>
module attributes {stable_mosaic.version = 11 : i64} {
  func.func @_neg_loss_kernel(%arg0: i32, %arg1: i32, %arg2: memref<8x256xf32, #tpu.memory_space<vmem>>, %arg3: memref<8x256xf32, #tpu.memory_space<vmem>>, %arg4: memref<1x8x128xf32, #tpu.memory_space<vmem>>) attributes {dimension_semantics = [#tpu.dimension_semantics<parallel>, #tpu.dimension_semantics<arbitrary>], iteration_bounds = array<i64: 1, 1>, scalar_prefetch = 0 : i64, scratch_operands = 0 : i64, tpu.core_type = #tpu.core_type<tc>, window_params = [{transform_indices = @transform_0, window_bounds = array<i64: 8, 256>}, {transform_indices = @transform_1, window_bounds = array<i64: 8, 256>}, {transform_indices = @transform_2, window_bounds = array<i64: 1, 8, 128>}]} {
    %c0_i32 = arith.constant 0 : i32
    %0 = arith.cmpi eq, %arg1, %c0_i32 : i32
    %1 = arith.extui %0 : i1 to i32
    %c0_i32_0 = arith.constant 0 : i32
    %2 = arith.cmpi ne, %1, %c0_i32_0 : i32
    scf.if %2 {
      %cst_12 = arith.constant 0.000000e+00 : f32
      %23 = vector.broadcast %cst_12 : f32 to vector<1x8x128xf32>
      %c0_13 = arith.constant 0 : index
      %c0_14 = arith.constant 0 : index
      %c0_15 = arith.constant 0 : index
      %24 = vector.load %arg4[%c0_13, %c0_14, %c0_15] : memref<1x8x128xf32, #tpu.memory_space<vmem>>, vector<1x8x128xf32>
      tpu.vector_store %arg4[%c0_13, %c0_14, %c0_15], %23 {strides = array<i32>} : memref<1x8x128xf32, #tpu.memory_space<vmem>>, vector<1x8x128xf32>,
    } else {
    }
    %c0 = arith.constant 0 : index
    %c0_1 = arith.constant 0 : index
    %3 = vector.load %arg2[%c0, %c0_1] : memref<8x256xf32, #tpu.memory_space<vmem>>, vector<8x256xf32>
    %c0_2 = arith.constant 0 : index
    %c0_3 = arith.constant 0 : index
    %4 = vector.load %arg3[%c0_2, %c0_3] : memref<8x256xf32, #tpu.memory_space<vmem>>, vector<8x256xf32>
    %cst = arith.constant 1.000000e+00 : f32
    %5 = vector.broadcast %cst : f32 to vector<8x256xf32>
    %6 = arith.subf %5, %4 : vector<8x256xf32>
    %7 = arith.mulf %6, %6 : vector<8x256xf32>
    %cst_4 = arith.constant 1.000000e+00 : f32
    %8 = vector.broadcast %cst_4 : f32 to vector<8x256xf32>
    %9 = arith.subf %8, %3 : vector<8x256xf32>
    %10 = math.log %9 : vector<8x256xf32>
    %11 = arith.mulf %3, %3 : vector<8x256xf32>
    %12 = arith.mulf %10, %11 : vector<8x256xf32>
    %13 = arith.mulf %7, %7 : vector<8x256xf32>
    %14 = arith.mulf %12, %13 : vector<8x256xf32>
    %c0_5 = arith.constant 0 : index
    %c0_6 = arith.constant 0 : index
    %c0_7 = arith.constant 0 : index
    %15 = vector.load %arg4[%c0_5, %c0_6, %c0_7] : memref<1x8x128xf32, #tpu.memory_space<vmem>>, vector<1x8x128xf32>
    %16 = vector.shape_cast %14 : vector<8x256xf32> to vector<1x8x256xf32>
    %cst_8 = arith.constant dense<0.000000e+00> : vector<1xf32>
    %17 = vector.multi_reduction <add>, %16, %cst_8 [1, 2] : vector<1x8x256xf32> to vector<1xf32>
    %18 = vector.shape_cast %17 : vector<1xf32> to vector<1x1x1xf32>
    %19 = vector.extract %18[0, 0, 0] : f32 from vector<1x1x1xf32>
    %20 = vector.broadcast %19 : f32 to vector<1x8x128xf32>
    %21 = arith.addf %15, %20 : vector<1x8x128xf32>
    %c0_9 = arith.constant 0 : index
    %c0_10 = arith.constant 0 : index
    %c0_11 = arith.constant 0 : index
    %22 = vector.load %arg4[%c0_9, %c0_10, %c0_11] : memref<1x8x128xf32, #tpu.memory_space<vmem>>, vector<1x8x128xf32>
    tpu.vector_store %arg4[%c0_9, %c0_10, %c0_11], %21 {strides = array<i32>} : memref<1x8x128xf32, #tpu.memory_space<vmem>>, vector<1x8x128xf32>,
    return
  }
  func.func @transform_0(%arg0: i32, %arg1: i32) -> (i32, i32) {
    %c0_i32 = arith.constant 0 : i32
    return %arg0, %arg1 : i32, i32
  }
  func.func @transform_1(%arg0: i32, %arg1: i32) -> (i32, i32) {
    %c0_i32 = arith.constant 0 : i32
    return %arg0, %arg1 : i32, i32
  }
  func.func @transform_2(%arg0: i32, %arg1: i32) -> (i32, i32, i32) {
    %c0_i32 = arith.constant 0 : i32
    %c0_i32_0 = arith.constant 0 : i32
    %c0_i32_1 = arith.constant 0 : i32
    return %arg0, %c0_i32, %c0_i32_0 : i32, i32, i32
  }
}

</mosaic_0001>

<llo_original>
// kernel: tpu_custom_call.1
$region0: #{tpu_custom_call.1}
  #allocation0 [shape = 'u32[]', space=smem, size = 0x4, offset = 0x4, fixed_abs, tag = 'smem constant byte address 0x4 - core index']
  #allocation1 [shape = 'u32[72,128]{1,0:T(1,128)}', space=vmem, size = 0x9000, scoped, tag = 'internal scratch']
  %s0 = inlined_call_operand.hbm [shape: f32[8,256], index: 0, kind: input, shape index: {}]
  %s1 = inlined_call_operand.hbm [shape: f32[8,256], index: 1, kind: input, shape index: {}]
  %s2 = inlined_call_operand.hbm [shape: f32[1,8,128], index: 2, kind: output, shape index: {}]
  %s3 = sld [smem:[#allocation0]]
  $region30: #{tpu_custom_call.1} parent=0
    _
  %s5 = ssub.s32 1, %s3
  %s6 = scalar_select 0, %s5, %s3
  $region1: #{tpu_custom_call.1} parent=0
    #allocation2 [shape = 'u8[8192]{0}', space=vmem, size = 0x2000, scoped, tag = 'input window, operand 0, single buffered']
    #allocation3 [shape = 's32[1]{0}', space=sflag, size = 0x4, scoped, tag = 'scoped memory for tpu_custom_call.1']
    #allocation4 [shape = 's32[1]{0}', space=sflag, size = 0x4, scoped, tag = 'scoped memory for tpu_custom_call.1']
    #allocation5 [shape = 'u8[8192]{0}', space=vmem, size = 0x2000, scoped, tag = 'input window, operand 1, single buffered']
    #allocation6 [shape = 's32[1]{0}', space=sflag, size = 0x4, scoped, tag = 'scoped memory for tpu_custom_call.1']
    #allocation7 [shape = 'u8[4096]{0}', space=vmem, size = 0x1000, scoped, tag = 'output window, operand 0, single buffered']
    %7 = vsyncpa [#allocation3], 0
    %8 = vsyncpa [#allocation6], 0
    %9 = vsyncpa [#allocation4], 0
    // Predicated region
    $region2: #{tpu_custom_call.1} parent=1 // pred_check
      _
    $region3: #{tpu_custom_call.1} parent=1 // pred_check_branch
      %11 = sbr.rel (0) target = $region5
    $region4: #{tpu_custom_call.1} parent=1 // pred_region
      %13 = vsyncadd [#allocation3], 0
      %s15 = sshll.u32 %s0, 4
      %s16 = int_to_ptr.hbm [resolvable:$true] %s15
      %s17 = sshll.u32 [#allocation2], 4
      %s18 = int_to_ptr.vmem [resolvable:$true] %s17
      %20 = dma.hbm_to_vmem [thread:$0]  %s16, 256, %s18, [#allocation3]
    $region5: #{tpu_custom_call.1} parent=1 // pred_fallthru
      _
    // Predicated region
    $region6: #{tpu_custom_call.1} parent=1 // pred_check
      _
    $region7: #{tpu_custom_call.1} parent=1 // pred_check_branch
      %22 = sbr.rel (0) target = $region9
    $region8: #{tpu_custom_call.1} parent=1 // pred_region
      %24 = vsyncadd [#allocation6], 0
      %s26 = sshll.u32 %s1, 4
      %s27 = int_to_ptr.hbm [resolvable:$true] %s26
      %s28 = sshll.u32 [#allocation5], 4
      %s29 = int_to_ptr.vmem [resolvable:$true] %s28
      %31 = dma.hbm_to_vmem [thread:$0]  %s27, 256, %s29, [#allocation6]
    $region9: #{tpu_custom_call.1} parent=1 // pred_fallthru
      _
    // Predicated region
    $region10: #{tpu_custom_call.1} parent=1 // pred_check
      _
    $region11: #{tpu_custom_call.1} parent=1 // pred_check_branch
      %33 = sbr.rel (0) target = $region13
    $region12: #{tpu_custom_call.1} parent=1 // pred_region
      %35 = dma.done [#allocation3], 256
    $region13: #{tpu_custom_call.1} parent=1 // pred_fallthru
      _
    // Predicated region
    $region14: #{tpu_custom_call.1} parent=1 // pred_check
      _
    $region15: #{tpu_custom_call.1} parent=1 // pred_check_branch
      %37 = sbr.rel (0) target = $region17
    $region16: #{tpu_custom_call.1} parent=1 // pred_region
      %39 = dma.done [#allocation6], 256
    $region17: #{tpu_custom_call.1} parent=1 // pred_fallthru
      _
    %p40 = scmp.eq.s32.totalorder 0, 0
    // Predicated region
    $region18: #{tpu_custom_call.1} parent=1 // pred_check
      %p41 = pneg %p40
    $region19: #{tpu_custom_call.1} parent=1 // pred_check_branch
      %43 = sbr.rel (%p41) target = $region21
    $region20: #{tpu_custom_call.1} parent=1 // pred_region
      %44 = vst [vmem:[#allocation7] sm:$0xff] 0.0
    $region21: #{tpu_custom_call.1} parent=1 // pred_fallthru
      _
    %v45 = vld [vmem:[#allocation2] sm:$0xff]
    %v46 = vld [vmem:[#allocation2 + $0x8] sm:$0xff]
    %v47 = vld [vmem:[#allocation5] sm:$0xff]
    %v48 = vld [vmem:[#allocation5 + $0x8] sm:$0xff]
    %v49 = vsub.f32 1.0, %v47
    %v50 = vsub.f32 1.0, %v48
    %v51 = vmul.f32 %v49, %v49
    %v52 = vmul.f32 %v50, %v50
    %v53 = vsub.f32 1.0, %v45
    %v54 = vsub.f32 1.0, %v46
    %v55 = vlog2.pop %v53
    %v56 = vmul.f32 %v55, 0.6931472
    %v57 = vlog2.pop %v54
    %v58 = vmul.f32 %v57, 0.6931472
    %v59 = vmul.f32 %v45, %v45
    %v60 = vmul.f32 %v46, %v46
    %v61 = vmul.f32 %v56, %v59
    %v62 = vmul.f32 %v58, %v60
    %v63 = vmul.f32 %v51, %v51
    %v64 = vmul.f32 %v52, %v52
    %v65 = vmul.f32 %v61, %v63
    %v66 = vmul.f32 %v62, %v64
    %v67 = vld [vmem:[#allocation7] sm:$0xff]
    %v68 = vadd.f32 %v65, %v66
    %69 = vadd.xlane.f32.xlu0 %v68
    %v70 = vpop.xlane.xlu0 %69
    %v71 = vrot.slane %v70, 4
    %v72 = vadd.f32 %v70, %v71
    %v73 = vrot.slane %v72, 2
    %v74 = vadd.f32 %v72, %v73
    %v75 = vrot.slane %v74, 1
    %v76 = vadd.f32 %v74, %v75
    %s77 = vtos %v76
    %v78 = vstv %s77
    %v79 = vadd.f32 %v67, %v78
    %80 = vst [vmem:[#allocation7] sm:$0xff] %v79
    // Predicated region
    $region22: #{tpu_custom_call.1} parent=1 // pred_check
      _
    $region23: #{tpu_custom_call.1} parent=1 // pred_check_branch
      %82 = sbr.rel (0) target = $region25
    $region24: #{tpu_custom_call.1} parent=1 // pred_region
      %84 = vsyncadd [#allocation4], 0
      %s86 = sshll.u32 [#allocation7], 4
      %s87 = int_to_ptr.vmem [resolvable:$true] %s86
      %s88 = sshll.u32 %s2, 4
      %s89 = int_to_ptr.hbm [resolvable:$true] %s88
      %91 = dma.vmem_to_hbm [thread:$0]  %s87, 128, %s89, [#allocation4]
    $region25: #{tpu_custom_call.1} parent=1 // pred_fallthru
      _
    // Predicated region
    $region26: #{tpu_custom_call.1} parent=1 // pred_check
      _
    $region27: #{tpu_custom_call.1} parent=1 // pred_check_branch
      %93 = sbr.rel (0) target = $region29
    $region28: #{tpu_custom_call.1} parent=1 // pred_region
      %95 = dma.done [#allocation4], 128
    $region29: #{tpu_custom_call.1} parent=1 // pred_fallthru
      _
    %96 = vsyncpa [#allocation3], 1
    %97 = vsyncpa [#allocation6], 1
    %98 = vsyncpa [#allocation4], 1

</llo_original>
